<compile_context>
chip_gen: v5e
topology: v5e:2x2
jax: 0.10.0
libtpu: 0.0.40
codegen_flags: <defaults>
</compile_context>

<pallas_src>
import functools
import math

import jax
import jax.numpy as jnp
from jax.experimental import pallas as pl
from jax.experimental.pallas import tpu as pltpu


def _label_smoothing_kernel(x_ref, tgt_ref, out_ref, acc_ref, *,
                            n_rows, v_total, tm, tv, padding_idx,
                            smooth_val, confidence, ent_const):
    i = pl.program_id(0)          # row-tile index   ("parallel")
    k = pl.program_id(1)          # vocab-tile index ("arbitrary", reduction)

    @pl.when(k == 0)
    def _():
        acc_ref[...] = jnp.zeros_like(acc_ref)

    x = x_ref[...]                                       # (tm, tv), input dtype
    tgt = tgt_ref[...]                                   # (tm, 1) int32
    col = jax.lax.broadcasted_iota(jnp.int32, (tm, tv), 1) + k * tv

    is_tgt = col == tgt
    x_tgt = jnp.sum(jnp.where(is_tgt, x, 0.0), axis=1, keepdims=True,
                    dtype=jnp.float32)                   # (tm, 1) f32

    if smooth_val > 0.0:
        drop = col == padding_idx
        if v_total % tv != 0:
            # Mask the vocab-padding columns of the last chunk.
            drop = jnp.logical_or(drop, col >= v_total)
        nonpad = jnp.sum(jnp.where(drop, 0.0, x), axis=1, keepdims=True,
                         dtype=jnp.float32)              # (tm, 1) f32
        cross_chunk = smooth_val * nonpad + (confidence - smooth_val) * x_tgt
    else:
        # smoothing == 0: only the target column carries probability mass.
        cross_chunk = confidence * x_tgt
    # TODO(synk): if v7x bundle dumps show the VALU add slot saturated, offload
    # the nonpad row-sum to the MXU (masked chunk @ ones column).

    acc_ref[...] += cross_chunk

    @pl.when(k == pl.num_programs(1) - 1)
    def _():
        row = jax.lax.broadcasted_iota(jnp.int32, (tm, 1), 0) + i * tm
        valid = jnp.logical_and(tgt != padding_idx, row < n_rows)
        per_row = jnp.where(valid, ent_const - acc_ref[...], 0.0)   # (tm, 1)
        partial = jnp.sum(per_row, axis=0, keepdims=True)           # (1, 1)
        out_ref[...] = jnp.broadcast_to(partial, out_ref.shape)     # (8, 128)


def _vmem_limit_bytes():
    """Per-generation scoped-VMEM limit: raise the default, leave headroom."""
    cap = 128 << 20
    try:
        cap = int(getattr(pltpu.get_tpu_info(), "vmem_capacity_bytes", cap))
    except Exception:
        pass
    # v5e/v6e (128 MiB physical) -> ~96 MiB; v7x (64 MiB physical) -> 48 MiB.
    return max(32 << 20, min((cap * 3) // 4, 100 << 20))


def _choose_tiles(n, v, itemsize, vmem_limit):
    # Vocab tile: full V when modest, otherwise a lane-aligned chunk so VMEM
    # no longer scales with vocab size.
    tv = v if v <= 8192 else 8192                       # multiple of 128
    # Row tile: target ~2 MiB per x block (tile sweeps show >=85% of HBM
    # roofline), capped by the VMEM budget (double-buffered x + iota/select
    # temporaries, ~(2*itemsize + 12) bytes per block element).
    per_row_bytes = tv * itemsize
    tm = min(1024, max(8, -((-(2 << 20)) // per_row_bytes)))
    tm = max(8, (tm // 8) * 8)
    budget = vmem_limit // 2
    while tm > 8 and tm * tv * (2 * itemsize + 12) > budget:
        tm = max(8, ((tm // 2) // 8) * 8)
    if n <= tm:
        tm = n
    return tm, tv


def label_smoothing_loss(x, target, *, size, padding_idx, smoothing):
    """x: (N, size) log-probs (f32 or bf16), target: (N,) int labels.

    Returns the scalar label-smoothed KLDivLoss (reduction='sum'), matching the
    PyTorch LabelSmoothing module's forward pass.
    """
    n, v = x.shape
    assert v == size and size > 2

    vmem_limit = _vmem_limit_bytes()
    tm, tv = _choose_tiles(n, v, jnp.dtype(x.dtype).itemsize, vmem_limit)
    grid = (pl.cdiv(n, tm), pl.cdiv(v, tv))

    # Compile-time constants of the smoothed target distribution.
    s = smoothing / (size - 2)
    c = 1.0 - smoothing
    ent = 0.0
    if s > 0.0:
        ent += (size - 2) * s * math.log(s)
    if c > 0.0:
        ent += c * math.log(c)

    tgt2d = target.astype(jnp.int32).reshape(n, 1)

    kernel = functools.partial(
        _label_smoothing_kernel,
        n_rows=n, v_total=v, tm=tm, tv=tv, padding_idx=padding_idx,
        smooth_val=float(s), confidence=float(c), ent_const=float(ent))

    partials = pl.pallas_call(
        kernel,
        out_shape=jax.ShapeDtypeStruct((grid[0] * 8, 128), jnp.float32),
        grid=grid,
        in_specs=[
            pl.BlockSpec((tm, tv), lambda i, k: (i, k)),
            pl.BlockSpec((tm, 1), lambda i, k: (i, 0)),
        ],
        out_specs=pl.BlockSpec((8, 128), lambda i, k: (i, 0)),
        scratch_shapes=[pltpu.VMEM((tm, 1), jnp.float32)],
        compiler_params=pltpu.CompilerParams(
            dimension_semantics=("parallel", "arbitrary"),
            vmem_limit_bytes=int(vmem_limit)),
    )(x, tgt2d)

    # Each row tile broadcast its partial into one lane-dense (8,128) slab;
    # take one element per slab and finish the reduction in JAX.
    return jnp.sum(partials[::8, 0])


def _reference(x, target, *, size, padding_idx, smoothing):
    confidence = 1.0 - smoothing
    n, v = x.shape
    col = jnp.arange(v)[None, :]
    tgt = target.reshape(n, 1)
    td = jnp.full((n, v), smoothing / (size - 2), dtype=jnp.float32)
    td = jnp.where(col == tgt, confidence, td)
    td = jnp.where(col == padding_idx, 0.0, td)
    td = jnp.where(tgt == padding_idx, 0.0, td)
    return jnp.sum(jnp.where(td > 0, td * (jnp.log(td) - x.astype(jnp.float32)),
                             0.0))


if __name__ == "__main__":
    # Module config (synthetic, deterministic, small).
    SIZE = 32          # vocab size
    PADDING_IDX = 0
    SMOOTHING = 0.1
    N = 8              # number of tokens (batch * seq flattened)

    key = jax.random.PRNGKey(0)
    kx, kt = jax.random.split(key)
    logits = jax.random.normal(kx, (N, SIZE), dtype=jnp.float32)
    x = jax.nn.log_softmax(logits, axis=-1)           # KLDivLoss expects log-probs
    target = jax.random.randint(kt, (N,), 0, SIZE, dtype=jnp.int32)
    # force a couple of padding targets to exercise the row-masking path
    target = target.at[3].set(PADDING_IDX).at[6].set(PADDING_IDX)

    loss = label_smoothing_loss(x, target, size=SIZE,
                                padding_idx=PADDING_IDX, smoothing=SMOOTHING)
    loss = jax.block_until_ready(loss)

    ref = _reference(x, target, size=SIZE, padding_idx=PADDING_IDX,
                     smoothing=SMOOTHING)
    assert jnp.allclose(loss, ref, rtol=1e-5, atol=1e-5), (loss, ref)
    print("KERNEL_OK")
</pallas_src>

<mosaic_0001>
module attributes {stable_mosaic.version = 11 : i64} {
  func.func @_label_smoothing_kernel(%arg0: i32, %arg1: i32, %arg2: memref<8x32xf32, #tpu.memory_space<vmem>>, %arg3: memref<8x1xi32, #tpu.memory_space<vmem>>, %arg4: memref<8x128xf32, #tpu.memory_space<vmem>>, %arg5: memref<8x1xf32, #tpu.memory_space<vmem>>) attributes {dimension_semantics = [#tpu.dimension_semantics<parallel>, #tpu.dimension_semantics<arbitrary>], iteration_bounds = array<i64: 1, 1>, scalar_prefetch = 0 : i64, scratch_operands = 1 : i64, tpu.core_type = #tpu.core_type<tc>, window_params = [{transform_indices = @transform_0, window_bounds = array<i64: 8, 32>}, {transform_indices = @transform_1, window_bounds = array<i64: 8, 1>}, {transform_indices = @transform_2, window_bounds = array<i64: 8, 128>}]} {
    %c0_i32 = arith.constant 0 : i32
    %0 = arith.cmpi eq, %arg1, %c0_i32 : i32
    %1 = arith.extui %0 : i1 to i32
    %c0_i32_0 = arith.constant 0 : i32
    %2 = arith.cmpi ne, %1, %c0_i32_0 : i32
    scf.if %2 {
      %cst_16 = arith.constant 0.000000e+00 : f32
      %32 = vector.broadcast %cst_16 : f32 to vector<8x1xf32>
      %c0_17 = arith.constant 0 : index
      %c0_18 = arith.constant 0 : index
      %33 = vector.load %arg5[%c0_17, %c0_18] : memref<8x1xf32, #tpu.memory_space<vmem>>, vector<8x1xf32>
      tpu.vector_store %arg5[%c0_17, %c0_18], %32 {strides = array<i32>} : memref<8x1xf32, #tpu.memory_space<vmem>>, vector<8x1xf32>,
    } else {
    }
    %c0 = arith.constant 0 : index
    %c0_1 = arith.constant 0 : index
    %3 = vector.load %arg2[%c0, %c0_1] : memref<8x32xf32, #tpu.memory_space<vmem>>, vector<8x32xf32>
    %c0_2 = arith.constant 0 : index
    %c0_3 = arith.constant 0 : index
    %4 = vector.load %arg3[%c0_2, %c0_3] : memref<8x1xi32, #tpu.memory_space<vmem>>, vector<8x1xi32>
    %5 = tpu.iota {dimensions = array<i32: 1>} : vector<8x32xi32>
    %c32_i32 = arith.constant 32 : i32
    %6 = arith.muli %arg1, %c32_i32 : i32
    %7 = vector.broadcast %6 : i32 to vector<8x32xi32>
    %8 = arith.addi %5, %7 : vector<8x32xi32>
    %9 = vector.broadcast %4 : vector<8x1xi32> to vector<8x32xi32>
    %10 = arith.cmpi eq, %8, %9 : vector<8x32xi32>
    %cst = arith.constant 0.000000e+00 : f32
    %11 = vector.broadcast %cst : f32 to vector<8x32xf32>
    %12 = arith.select %10, %3, %11 : vector<8x32xi1>, vector<8x32xf32>
    %cst_4 = arith.constant dense<0.000000e+00> : vector<8xf32>
    %13 = vector.multi_reduction <add>, %12, %cst_4 [1] : vector<8x32xf32> to vector<8xf32>
    %14 = vector.shape_cast %13 : vector<8xf32> to vector<8x1xf32>
    %c0_i32_5 = arith.constant 0 : i32
    %15 = vector.broadcast %c0_i32_5 : i32 to vector<8x32xi32>
    %16 = arith.cmpi eq, %8, %15 : vector<8x32xi32>
    %cst_6 = arith.constant 0.000000e+00 : f32
    %17 = vector.broadcast %cst_6 : f32 to vector<8x32xf32>
    %18 = arith.select %16, %17, %3 : vector<8x32xi1>, vector<8x32xf32>
    %cst_7 = arith.constant dense<0.000000e+00> : vector<8xf32>
    %19 = vector.multi_reduction <add>, %18, %cst_7 [1] : vector<8x32xf32> to vector<8xf32>
    %20 = vector.shape_cast %19 : vector<8xf32> to vector<8x1xf32>
    %cst_8 = arith.constant 0.00333333341 : f32
    %21 = vector.broadcast %cst_8 : f32 to vector<8x1xf32>
    %22 = arith.mulf %21, %20 : vector<8x1xf32>
    %cst_9 = arith.constant 0.896666646 : f32
    %23 = vector.broadcast %cst_9 : f32 to vector<8x1xf32>
    %24 = arith.mulf %23, %14 : vector<8x1xf32>
    %25 = arith.addf %22, %24 : vector<8x1xf32>
    %c0_10 = arith.constant 0 : index
    %c0_11 = arith.constant 0 : index
    %26 = vector.load %arg5[%c0_10, %c0_11] : memref<8x1xf32, #tpu.memory_space<vmem>>, vector<8x1xf32>
    %27 = arith.addf %26, %25 : vector<8x1xf32>
    %c0_12 = arith.constant 0 : index
    %c0_13 = arith.constant 0 : index
    %28 = vector.load %arg5[%c0_12, %c0_13] : memref<8x1xf32, #tpu.memory_space<vmem>>, vector<8x1xf32>
    tpu.vector_store %arg5[%c0_12, %c0_13], %27 {strides = array<i32>} : memref<8x1xf32, #tpu.memory_space<vmem>>, vector<8x1xf32>,
    %c0_i32_14 = arith.constant 0 : i32
    %29 = arith.cmpi eq, %arg1, %c0_i32_14 : i32
    %30 = arith.extui %29 : i1 to i32
    %c0_i32_15 = arith.constant 0 : i32
    %31 = arith.cmpi ne, %30, %c0_i32_15 : i32
    scf.if %31 {
      %32 = tpu.iota {dimensions = array<i32: 0>} : vector<8x1xi32>
      %c8_i32 = arith.constant 8 : i32
      %33 = arith.muli %arg0, %c8_i32 : i32
      %34 = vector.broadcast %33 : i32 to vector<8x1xi32>
      %35 = arith.addi %32, %34 : vector<8x1xi32>
      %c0_i32_16 = arith.constant 0 : i32
      %36 = vector.broadcast %c0_i32_16 : i32 to vector<8x1xi32>
      %37 = arith.cmpi ne, %4, %36 : vector<8x1xi32>
      %c8_i32_17 = arith.constant 8 : i32
      %38 = vector.broadcast %c8_i32_17 : i32 to vector<8x1xi32>
      %39 = arith.cmpi slt, %35, %38 : vector<8x1xi32>
      %40 = arith.andi %37, %39 : vector<8x1xi1>
      %c0_18 = arith.constant 0 : index
      %c0_19 = arith.constant 0 : index
      %41 = vector.load %arg5[%c0_18, %c0_19] : memref<8x1xf32, #tpu.memory_space<vmem>>, vector<8x1xf32>
      %cst_20 = arith.constant -0.665202737 : f32
      %42 = vector.broadcast %cst_20 : f32 to vector<8x1xf32>
      %43 = arith.subf %42, %41 : vector<8x1xf32>
      %cst_21 = arith.constant 0.000000e+00 : f32
      %44 = vector.broadcast %cst_21 : f32 to vector<8x1xf32>
      %45 = arith.select %40, %43, %44 : vector<8x1xi1>, vector<8x1xf32>
      %cst_22 = arith.constant dense<0.000000e+00> : vector<1xf32>
      %46 = vector.multi_reduction <add>, %45, %cst_22 [0] : vector<8x1xf32> to vector<1xf32>
      %47 = vector.shape_cast %46 : vector<1xf32> to vector<1x1xf32>
      %48 = vector.shape_cast %47 : vector<1x1xf32> to vector<1x1xf32>
      %49 = vector.broadcast %48 : vector<1x1xf32> to vector<8x128xf32>
      %c0_23 = arith.constant 0 : index
      %c0_24 = arith.constant 0 : index
      %50 = vector.load %arg4[%c0_23, %c0_24] : memref<8x128xf32, #tpu.memory_space<vmem>>, vector<8x128xf32>
      tpu.vector_store %arg4[%c0_23, %c0_24], %49 {strides = array<i32>} : memref<8x128xf32, #tpu.memory_space<vmem>>, vector<8x128xf32>,
    } else {
    }
    return
  }
  func.func @transform_0(%arg0: i32, %arg1: i32) -> (i32, i32) {
    %c0_i32 = arith.constant 0 : i32
    return %arg0, %arg1 : i32, i32
  }
  func.func @transform_1(%arg0: i32, %arg1: i32) -> (i32, i32) {
    %c0_i32 = arith.constant 0 : i32
    %c0_i32_0 = arith.constant 0 : i32
    return %arg0, %c0_i32 : i32, i32
  }
  func.func @transform_2(%arg0: i32, %arg1: i32) -> (i32, i32) {
    %c0_i32 = arith.constant 0 : i32
    %c0_i32_0 = arith.constant 0 : i32
    return %arg0, %c0_i32 : i32, i32
  }
}

</mosaic_0001>

<llo_original>
// kernel: tpu_custom_call.1
$region0: #{tpu_custom_call.1}
  #allocation0 [shape = 'u32[]', space=smem, size = 0x4, offset = 0x4, fixed_abs, tag = 'smem constant byte address 0x4 - core index']
  #allocation1 [shape = 'u32[72,128]{1,0:T(1,128)}', space=vmem, size = 0x9000, scoped, tag = 'internal scratch']
  #allocation2 [shape = 'f32[8,1]{1,0:T(8,128)}', space=vmem, size = 0x1000, scoped, tag = 'scratch operand']
  %s0 = inlined_call_operand.vmem [shape: f32[8,32], index: 0, kind: input, shape index: {}]
  %s1 = inlined_call_operand.vmem [shape: s32[8,1], index: 1, kind: input, shape index: {}]
  %s2 = inlined_call_operand.hbm [shape: f32[8,128], index: 2, kind: output, shape index: {}]
  %s3 = sld [smem:[#allocation0]]
  $region26: #{tpu_custom_call.1} parent=0
    _
  %s5 = ssub.s32 1, %s3
  %s6 = scalar_select 0, %s5, %s3
  $region1: #{tpu_custom_call.1} parent=0
    #allocation3 [shape = 'u8[4096]{0}', space=vmem, size = 0x1000, scoped, tag = 'output window, operand 0, single buffered']
    #allocation4 [shape = 's32[1]{0}', space=sflag, size = 0x4, scoped, tag = 'scoped memory for tpu_custom_call.1']
    %7 = vsyncpa [#allocation4], 0
    // Predicated region
    $region2: #{tpu_custom_call.1} parent=1 // pred_check
      _
    $region3: #{tpu_custom_call.1} parent=1 // pred_check_branch
      %9 = sbr.rel (0) target = $region5
    $region4: #{tpu_custom_call.1} parent=1 // pred_region
      _
    $region5: #{tpu_custom_call.1} parent=1 // pred_fallthru
      _
    // Predicated region
    $region6: #{tpu_custom_call.1} parent=1 // pred_check
      _
    $region7: #{tpu_custom_call.1} parent=1 // pred_check_branch
      %11 = sbr.rel (0) target = $region9
    $region8: #{tpu_custom_call.1} parent=1 // pred_region
      _
    $region9: #{tpu_custom_call.1} parent=1 // pred_fallthru
      _
    %p12 = scmp.eq.s32.totalorder 0, 0
    // Predicated region
    $region10: #{tpu_custom_call.1} parent=1 // pred_check
      %p13 = pneg %p12
    $region11: #{tpu_custom_call.1} parent=1 // pred_check_branch
      %15 = sbr.rel (%p13) target = $region13
    $region12: #{tpu_custom_call.1} parent=1 // pred_region
      %vm16 = vcmask 7168
      %17 = vst.msk [vmem:[#allocation2] sm:$0xff] %vm16, 0.0
    $region13: #{tpu_custom_call.1} parent=1 // pred_fallthru
      _
    %v18 = vld [vmem:[%s0] sm:$0xff]
    %v19 = vld [vmem:[%s1] sm:$0xff]
    %v20 = vlaneseq
    %v21 = vand.u32 %v20, 127
    %s22 = smul.u32 0, 32
    %v23 = vstv %s22
    %v24 = vadd.s32 %v21, %v23
    %25 = vset.pattern.permute.xlu0 0
    %26 = vperm.xlu0 %25, %v19
    %v27 = vpop.permute.xlu0 %26
    %vm28 = vcmp.eq.s32.totalorder %v24, %v27
    %v29 = vsel %vm28, %v18, 0.0
    %vm30 = vcmask 261120
    %v31 = vsel %vm30, %v29, 0.0
    %32 = vadd.xlane.f32.xlu0 %v31
    %v33 = vpop.xlane.xlu0 %32
    %vm34 = vcmp.eq.s32.totalorder %v24, 0
    %v35 = vsel %vm34, 0.0, %v18
    %v36 = vsel %vm30, %v35, 0.0
    %37 = vadd.xlane.f32.xlu0 %v36
    %v38 = vpop.xlane.xlu0 %37
    %v39 = vmul.f32 %v38, 0.0033333334
    %v40 = vmul.f32 %v33, 0.89666665
    %v41 = vadd.f32 %v39, %v40
    %v42 = vld [vmem:[#allocation2] sm:$0xff]
    %v43 = vadd.f32 %v42, %v41
    %vm44 = vcmask 7168
    %45 = vst.msk [vmem:[#allocation2] sm:$0xff] %vm44, %v43
    // Predicated region
    $region14: #{tpu_custom_call.1} parent=1 // pred_check
      %p46 = pneg %p12
    $region15: #{tpu_custom_call.1} parent=1 // pred_check_branch
      %48 = sbr.rel (%p46) target = $region17
    $region16: #{tpu_custom_call.1} parent=1 // pred_region
      %v49 = vlaneseq
      %v50 = vshrl.u32 %v49, 7
      %s51 = smul.u32 0, 8
      %v52 = vstv %s51
      %v53 = vadd.s32 %v50, %v52
      %vm54 = vcmp.ne.s32.totalorder %v19, 0
      %vm55 = vcmp.lt.s32.totalorder %v53, 8
      %vm56 = vmand %vm54, %vm55
      %v57 = vld [vmem:[#allocation2] sm:$0xff]
      %v58 = vsub.f32 -0.66520274, %v57
      %v59 = vsel %vm56, %v58, 0.0
      %v60 = vsel %vm44, %v59, 0.0
      %v61 = vrot.slane %v60, 4
      %v62 = vadd.f32 %v60, %v61
      %v63 = vrot.slane %v62, 2
      %v64 = vadd.f32 %v62, %v63
      %v65 = vrot.slane %v64, 1
      %v66 = vadd.f32 %v64, %v65
      %68 = vset.pattern.permute.xlu0 0
      %69 = vperm.xlu0 %68, %v66
      %v70 = vpop.permute.xlu0 %69
      %72 = vst [vmem:[#allocation3] sm:$0xff] %v70
    $region17: #{tpu_custom_call.1} parent=1 // pred_fallthru
      _
    // Predicated region
    $region18: #{tpu_custom_call.1} parent=1 // pred_check
      _
    $region19: #{tpu_custom_call.1} parent=1 // pred_check_branch
      %74 = sbr.rel (0) target = $region21
    $region20: #{tpu_custom_call.1} parent=1 // pred_region
      %76 = vsyncadd [#allocation4], 0
      %s78 = sshll.u32 [#allocation3], 4
      %s79 = int_to_ptr.vmem [resolvable:$true] %s78
      %s80 = sshll.u32 %s2, 4
      %s81 = int_to_ptr.hbm [resolvable:$true] %s80
      %83 = dma.vmem_to_hbm [thread:$0]  %s79, 128, %s81, [#allocation4]
    $region21: #{tpu_custom_call.1} parent=1 // pred_fallthru
      _
    // Predicated region
    $region22: #{tpu_custom_call.1} parent=1 // pred_check
      _
    $region23: #{tpu_custom_call.1} parent=1 // pred_check_branch
      %85 = sbr.rel (0) target = $region25
    $region24: #{tpu_custom_call.1} parent=1 // pred_region
      %87 = dma.done [#allocation4], 128
    $region25: #{tpu_custom_call.1} parent=1 // pred_fallthru
      _
    %88 = vsyncpa [#allocation4], 1

</llo_original>
